<compile_context>
chip_gen: v5e
topology: v5e:2x2
jax: 0.10.0
libtpu: 0.0.40
codegen_flags: <defaults>
</compile_context>

<pallas_src>
import functools

import jax
import jax.numpy as jnp
from jax.experimental import pallas as pl
from jax.experimental.pallas import tpu as pltpu


LANE = 128


def _round_up(x, m):
    return ((x + m - 1) // m) * m


# ------------------------------ fused kernel ---------------------------------
def _gnn_fused_kernel(batch_ref, mask_ref, u_ref, w_ref, *refs,
                      type_counts, do_proj, dropout_p, uq_samples):
    """One grid step: per-type projection, batch gather, masked softmax
    attention, and all MC-dropout UQ samples (mean + biased variance)."""
    T = len(type_counts)
    h0_refs = refs[:T]
    proj_refs = refs[T:2 * T] if do_proj else ()
    base = 2 * T if do_proj else T
    mean_ref, var_ref = refs[base], refs[base + 1]
    h0p_ref = refs[base + 2]                                   # VMEM scratch (N_pad, E)

    n_pad, E = h0p_ref.shape
    B = mean_ref.shape[0]

    # Per-node-type projection written straight into a persistent VMEM scratch
    # (no in-kernel concatenate; zero-init covers the padded tail rows).
    h0p_ref[...] = jnp.zeros_like(h0p_ref)
    off = 0
    for i, cnt in enumerate(type_counts):
        h = h0_refs[i][...]
        if do_proj:
            blk = jnp.dot(h, proj_refs[i][...], preferred_element_type=jnp.float32)
        else:
            blk = h
        h0p_ref[pl.ds(off, cnt), :] = blk
        off += cnt
    h0_p = h0p_ref[...]                                                    # (N_pad, E)

    # Batch gather as a one-hot matmul; one-hot built in-kernel from int32 ids.
    col = jax.lax.broadcasted_iota(jnp.int32, (B, n_pad), 1)
    sel = (col == batch_ref[...]).astype(jnp.float32)                      # (B, N_pad)
    h0_batch_p = jnp.dot(sel, h0_p, preferred_element_type=jnp.float32)    # (B, E)

    # Attention scores: single (2,E) x (N,E)^T matmul (rows = w1^T, w2^T).
    scores = jax.lax.dot_general(w_ref[...], h0_p, (((1,), (1,)), ((), ())),
                                 preferred_element_type=jnp.float32)       # (2, N_pad)
    s1 = jnp.sum(sel * scores[0:1, :], axis=1, keepdims=True)              # (B, 1)
    s2 = scores[1:2, :]                                                    # (1, N_pad)

    mask_add = jnp.where(mask_ref[...] != 0.0, 0.0, -1e30)
    att_score = s1 + s2 + mask_add                                         # (B, N_pad)

    # softmax over the node axis (torch.softmax(att_score, 1)), exact divide.
    att_max = jnp.max(att_score, axis=1, keepdims=True)
    e = jnp.exp(att_score - att_max)
    att = e / jnp.sum(e, axis=1, keepdims=True)                            # (B, N_pad)

    # All UQ_samples dropout samples in ONE lane-stacked matmul.
    if dropout_p > 0.0:
        inv_keep = 1.0 / (1.0 - dropout_p)
        h0_scaled = h0_p * inv_keep                                        # scale once
        h0_rep = jnp.concatenate([h0_scaled] * uq_samples, axis=1)         # (N_pad, UQ*E)
        h_drop = jnp.where(u_ref[...] >= dropout_p, h0_rep, 0.0)
        s_all = jnp.dot(att, h_drop, preferred_element_type=jnp.float32)   # (B, UQ*E)
        samples = [s_all[:, k * E:(k + 1) * E] for k in range(uq_samples)]

        inv_s = 1.0 / float(uq_samples)
        mean_drop = samples[0]
        for s in samples[1:]:
            mean_drop = mean_drop + s
        mean_drop = mean_drop * inv_s
        var = (samples[0] - mean_drop) ** 2
        for s in samples[1:]:
            var = var + (s - mean_drop) ** 2
        var = var * inv_s                                                  # unbiased=False
    else:
        mean_drop = jnp.dot(att, h0_p, preferred_element_type=jnp.float32)
        var = jnp.zeros_like(mean_drop)

    # `+ H0_batch_p` hoisted out of the sample loop (variance is offset-free).
    mean_ref[...] = mean_drop + h0_batch_p                                 # (B, E) lane-dense
    var_ref[...] = var


# ------------------------------- wrapper --------------------------------------
def _full_spec(shape):
    nd = len(shape)
    return pl.BlockSpec(shape, lambda i, _nd=nd: (0,) * _nd)


def gnn_forward_pallas(h0_list, proj_list, att_w, batch_ids, mask, u_bits,
                       *, dropout_p, uq_samples):
    B = batch_ids.shape[0]
    E = att_w.shape[1]
    n_pad = mask.shape[1]
    type_counts = tuple(int(h.shape[0]) for h in h0_list)
    do_proj = len(proj_list) > 0

    kernel = functools.partial(
        _gnn_fused_kernel,
        type_counts=type_counts, do_proj=do_proj,
        dropout_p=float(dropout_p), uq_samples=int(uq_samples))

    inputs = [batch_ids.reshape(B, 1).astype(jnp.int32), mask, u_bits, att_w,
              *h0_list, *proj_list]
    in_specs = [_full_spec(x.shape) for x in inputs]
    out_specs = (_full_spec((B, E)), _full_spec((B, E)))

    mean, var = pl.pallas_call(
        kernel,
        out_shape=(jax.ShapeDtypeStruct((B, E), jnp.float32),
                   jax.ShapeDtypeStruct((B, E), jnp.float32)),
        grid=(1,),                       # single step: whole problem in one launch
        in_specs=in_specs,
        out_specs=out_specs,
        scratch_shapes=[pltpu.VMEM((n_pad, E), jnp.float32)],
        compiler_params=pltpu.CompilerParams(
            dimension_semantics=("arbitrary",),
            vmem_limit_bytes=32 * 1024 * 1024),
    )(*inputs)
    return mean, var


# --------------------------------- model --------------------------------------
class GNNModel:
    """JAX/Pallas port of the PyTorch GNN module (forward pass only).

    `nodes` is a dict {node_type: node_count}. Node counts should be multiples
    of 8 (sublane-aligned scratch writes); the node axis is zero-padded to a
    multiple of 128 lanes inside forward().
    """

    def __init__(self, node_num, embedding_size, nodes, dropout, UQ_samples, proj, key):
        self.E = int(embedding_size)
        self.dropout_p = float(dropout)
        self.UQ_samples = int(UQ_samples)
        self.proj = proj
        self.node_types = list(nodes.keys())

        keys = list(jax.random.split(key, 2 * len(nodes) + 2))
        self.H0 = {}
        self.proj_m = {}
        ki = 0
        for n_t in self.node_types:
            cnt = int(nodes[n_t])
            self.H0[n_t] = jax.random.normal(keys[ki], (cnt, self.E), jnp.float32) * 0.01
            ki += 1
            if proj == 'affine':
                self.proj_m[n_t] = (jax.random.normal(keys[ki], (self.E, self.E),
                                                      jnp.float32) * 0.01)
            # TODO(synk): 'hyperplane' and 'MLP' projection modes are not ported
            # into the fused kernel; any other `proj` value uses the identity
            # projection (H0_n_p = H0[n_t]), matching the torch `else` branch.
            ki += 1
        self.att_w1 = jax.random.normal(keys[ki], (self.E, 1), jnp.float32) * 0.01
        self.att_w2 = jax.random.normal(keys[ki + 1], (self.E, 1), jnp.float32) * 0.01
        self.total_nodes = sum(int(nodes[n_t]) for n_t in self.node_types)

    def forward(self, batch, mask, dropout_key):
        N = self.total_nodes
        n_pad = max(LANE, _round_up(N, LANE))

        mask_f = mask.astype(jnp.float32)
        if n_pad > N:
            mask_f = jnp.pad(mask_f, ((0, 0), (0, n_pad - N)))

        # MC-dropout randomness drawn host-side (one uniform block covering all
        # UQ samples), thresholded inside the kernel (inverted-dropout scaling).
        u_bits = jax.random.uniform(dropout_key, (n_pad, self.UQ_samples * self.E),
                                    dtype=jnp.float32)

        att_w = jnp.concatenate([self.att_w1, self.att_w2], axis=1).T      # (2, E)
        h0_list = [self.H0[n_t] for n_t in self.node_types]
        proj_list = ([self.proj_m[n_t] for n_t in self.node_types]
                     if self.proj == 'affine' else [])
        return gnn_forward_pallas(h0_list, proj_list, att_w, batch, mask_f, u_bits,
                                  dropout_p=self.dropout_p,
                                  uq_samples=self.UQ_samples)


# ---------------------------------- main ---------------------------------------
if __name__ == "__main__":
    key = jax.random.PRNGKey(0)
    k_model, k_batch, k_mask, k_drop = jax.random.split(key, 4)

    E = 128                       # embedding_size (lane-dense)
    B = 8                         # batch rows
    nodes = {'user': 16, 'item': 24}
    N = sum(nodes.values())       # 40 total nodes (padded to 128 inside forward)
    dropout = 0.1
    UQ_samples = 4
    proj = 'affine'

    model = GNNModel(node_num=N, embedding_size=E, nodes=nodes,
                     dropout=dropout, UQ_samples=UQ_samples, proj=proj, key=k_model)

    batch = jax.random.randint(k_batch, (B,), 0, N, dtype=jnp.int32)
    mask = (jax.random.uniform(k_mask, (B, N)) > 0.3).astype(jnp.float32)
    # guarantee at least one unmasked node per row (matches a sane adjacency mask)
    mask = mask.at[jnp.arange(B), batch].set(1.0)

    mean, var = model.forward(batch, mask, k_drop)
    jax.block_until_ready((mean, var))
    assert bool(jnp.isfinite(mean).all()) and bool(jnp.isfinite(var).all())
    print("KERNEL_OK")
</pallas_src>

<mosaic_0001>
module attributes {stable_mosaic.version = 11 : i64} {
  func.func @_gnn_fused_kernel(%arg0: i32, %arg1: memref<8x1xi32, #tpu.memory_space<vmem>>, %arg2: memref<8x128xf32, #tpu.memory_space<vmem>>, %arg3: memref<128x512xf32, #tpu.memory_space<vmem>>, %arg4: memref<2x128xf32, #tpu.memory_space<vmem>>, %arg5: memref<16x128xf32, #tpu.memory_space<vmem>>, %arg6: memref<24x128xf32, #tpu.memory_space<vmem>>, %arg7: memref<128x128xf32, #tpu.memory_space<vmem>>, %arg8: memref<128x128xf32, #tpu.memory_space<vmem>>, %arg9: memref<8x128xf32, #tpu.memory_space<vmem>>, %arg10: memref<8x128xf32, #tpu.memory_space<vmem>>, %arg11: memref<128x128xf32, #tpu.memory_space<vmem>>) attributes {dimension_semantics = [#tpu.dimension_semantics<arbitrary>], iteration_bounds = array<i64: 1>, scalar_prefetch = 0 : i64, scratch_operands = 1 : i64, tpu.core_type = #tpu.core_type<tc>, window_params = [{pipeline_mode = #tpu.pipeline_mode<synchronous>, transform_indices = @transform_0, window_bounds = array<i64: 8, 1>}, {pipeline_mode = #tpu.pipeline_mode<synchronous>, transform_indices = @transform_1, window_bounds = array<i64: 8, 128>}, {pipeline_mode = #tpu.pipeline_mode<synchronous>, transform_indices = @transform_2, window_bounds = array<i64: 128, 512>}, {pipeline_mode = #tpu.pipeline_mode<synchronous>, transform_indices = @transform_3, window_bounds = array<i64: 2, 128>}, {pipeline_mode = #tpu.pipeline_mode<synchronous>, transform_indices = @transform_4, window_bounds = array<i64: 16, 128>}, {pipeline_mode = #tpu.pipeline_mode<synchronous>, transform_indices = @transform_5, window_bounds = array<i64: 24, 128>}, {pipeline_mode = #tpu.pipeline_mode<synchronous>, transform_indices = @transform_6, window_bounds = array<i64: 128, 128>}, {pipeline_mode = #tpu.pipeline_mode<synchronous>, transform_indices = @transform_7, window_bounds = array<i64: 128, 128>}, {pipeline_mode = #tpu.pipeline_mode<synchronous>, transform_indices = @transform_8, window_bounds = array<i64: 8, 128>}, {pipeline_mode = #tpu.pipeline_mode<synchronous>, transform_indices = @transform_9, window_bounds = array<i64: 8, 128>}]} {
    %cst = arith.constant 0.000000e+00 : f32
    %0 = vector.broadcast %cst : f32 to vector<128x128xf32>
    %c0 = arith.constant 0 : index
    %c0_0 = arith.constant 0 : index
    %1 = vector.load %arg11[%c0, %c0_0] : memref<128x128xf32, #tpu.memory_space<vmem>>, vector<128x128xf32>
    tpu.vector_store %arg11[%c0, %c0_0], %0 {strides = array<i32>} : memref<128x128xf32, #tpu.memory_space<vmem>>, vector<128x128xf32>,
    %c0_1 = arith.constant 0 : index
    %c0_2 = arith.constant 0 : index
    %2 = vector.load %arg5[%c0_1, %c0_2] : memref<16x128xf32, #tpu.memory_space<vmem>>, vector<16x128xf32>
    %c0_3 = arith.constant 0 : index
    %c0_4 = arith.constant 0 : index
    %3 = vector.load %arg7[%c0_3, %c0_4] : memref<128x128xf32, #tpu.memory_space<vmem>>, vector<128x128xf32>
    %cst_5 = arith.constant dense<0.000000e+00> : vector<16x128xf32>
    %4 = tpu.matmul %2, %3, %cst_5 {dimension_numbers = #tpu.dot_dimension_numbers<[1], [0], [0], [1], [0, 0, 1, 1], [], []>} : vector<16x128xf32>, vector<128x128xf32>, vector<16x128xf32> -> vector<16x128xf32>
    %c0_6 = arith.constant 0 : index
    %c0_7 = arith.constant 0 : index
    %5 = vector.load %arg11[%c0_6, %c0_7] : memref<128x128xf32, #tpu.memory_space<vmem>>, vector<16x128xf32>
    tpu.vector_store %arg11[%c0_6, %c0_7], %4 {strides = array<i32>} : memref<128x128xf32, #tpu.memory_space<vmem>>, vector<16x128xf32>,
    %c0_8 = arith.constant 0 : index
    %c0_9 = arith.constant 0 : index
    %6 = vector.load %arg6[%c0_8, %c0_9] : memref<24x128xf32, #tpu.memory_space<vmem>>, vector<24x128xf32>
    %c0_10 = arith.constant 0 : index
    %c0_11 = arith.constant 0 : index
    %7 = vector.load %arg8[%c0_10, %c0_11] : memref<128x128xf32, #tpu.memory_space<vmem>>, vector<128x128xf32>
    %cst_12 = arith.constant dense<0.000000e+00> : vector<24x128xf32>
    %8 = tpu.matmul %6, %7, %cst_12 {dimension_numbers = #tpu.dot_dimension_numbers<[1], [0], [0], [1], [0, 0, 1, 1], [], []>} : vector<24x128xf32>, vector<128x128xf32>, vector<24x128xf32> -> vector<24x128xf32>
    %c16 = arith.constant 16 : index
    %c0_13 = arith.constant 0 : index
    %9 = vector.load %arg11[%c16, %c0_13] : memref<128x128xf32, #tpu.memory_space<vmem>>, vector<24x128xf32>
    tpu.vector_store %arg11[%c16, %c0_13], %8 {strides = array<i32>} : memref<128x128xf32, #tpu.memory_space<vmem>>, vector<24x128xf32>,
    %c0_14 = arith.constant 0 : index
    %c0_15 = arith.constant 0 : index
    %10 = vector.load %arg11[%c0_14, %c0_15] : memref<128x128xf32, #tpu.memory_space<vmem>>, vector<128x128xf32>
    %11 = tpu.iota {dimensions = array<i32: 1>} : vector<8x128xi32>
    %c0_16 = arith.constant 0 : index
    %c0_17 = arith.constant 0 : index
    %12 = vector.load %arg1[%c0_16, %c0_17] : memref<8x1xi32, #tpu.memory_space<vmem>>, vector<8x1xi32>
    %13 = vector.broadcast %12 : vector<8x1xi32> to vector<8x128xi32>
    %14 = arith.cmpi eq, %11, %13 : vector<8x128xi32>
    %15 = arith.extui %14 : vector<8x128xi1> to vector<8x128xi32>
    %16 = arith.sitofp %15 : vector<8x128xi32> to vector<8x128xf32>
    %cst_18 = arith.constant dense<0.000000e+00> : vector<8x128xf32>
    %17 = tpu.matmul %16, %10, %cst_18 {dimension_numbers = #tpu.dot_dimension_numbers<[1], [0], [0], [1], [0, 0, 1, 1], [], []>} : vector<8x128xf32>, vector<128x128xf32>, vector<8x128xf32> -> vector<8x128xf32>
    %c0_19 = arith.constant 0 : index
    %c0_20 = arith.constant 0 : index
    %18 = vector.load %arg4[%c0_19, %c0_20] : memref<2x128xf32, #tpu.memory_space<vmem>>, vector<2x128xf32>
    %cst_21 = arith.constant dense<0.000000e+00> : vector<2x128xf32>
    %19 = tpu.matmul %18, %10, %cst_21 {dimension_numbers = #tpu.dot_dimension_numbers<[1], [1], [0], [0], [0, 0, 1, 0], [], []>} : vector<2x128xf32>, vector<128x128xf32>, vector<2x128xf32> -> vector<2x128xf32>
    %20 = vector.extract_strided_slice %19 {offsets = [0, 0], sizes = [1, 128], strides = [1, 1]} : vector<2x128xf32> to vector<1x128xf32>
    %21 = vector.broadcast %20 : vector<1x128xf32> to vector<8x128xf32>
    %22 = arith.mulf %16, %21 : vector<8x128xf32>
    %cst_22 = arith.constant dense<0.000000e+00> : vector<8xf32>
    %23 = vector.multi_reduction <add>, %22, %cst_22 [1] : vector<8x128xf32> to vector<8xf32>
    %24 = vector.shape_cast %23 : vector<8xf32> to vector<8x1xf32>
    %25 = vector.extract_strided_slice %19 {offsets = [1, 0], sizes = [1, 128], strides = [1, 1]} : vector<2x128xf32> to vector<1x128xf32>
    %c0_23 = arith.constant 0 : index
    %c0_24 = arith.constant 0 : index
    %26 = vector.load %arg2[%c0_23, %c0_24] : memref<8x128xf32, #tpu.memory_space<vmem>>, vector<8x128xf32>
    %cst_25 = arith.constant 0.000000e+00 : f32
    %27 = vector.broadcast %cst_25 : f32 to vector<8x128xf32>
    %28 = arith.cmpf one, %26, %27 : vector<8x128xf32>
    %cst_26 = arith.constant 0.000000e+00 : f32
    %cst_27 = arith.constant -1.000000e+30 : f32
    %29 = vector.broadcast %cst_26 : f32 to vector<8x128xf32>
    %30 = vector.broadcast %cst_27 : f32 to vector<8x128xf32>
    %31 = arith.select %28, %29, %30 : vector<8x128xi1>, vector<8x128xf32>
    %32 = vector.broadcast %24 : vector<8x1xf32> to vector<8x128xf32>
    %33 = vector.broadcast %25 : vector<1x128xf32> to vector<8x128xf32>
    %34 = arith.addf %32, %33 : vector<8x128xf32>
    %35 = arith.addf %34, %31 : vector<8x128xf32>
    %cst_28 = arith.constant dense<0xFF800000> : vector<8xf32>
    %36 = vector.multi_reduction <maximumf>, %35, %cst_28 [1] : vector<8x128xf32> to vector<8xf32>
    %37 = vector.shape_cast %36 : vector<8xf32> to vector<8x1xf32>
    %38 = vector.broadcast %37 : vector<8x1xf32> to vector<8x128xf32>
    %39 = arith.subf %35, %38 : vector<8x128xf32>
    %40 = math.exp %39 : vector<8x128xf32>
    %cst_29 = arith.constant dense<0.000000e+00> : vector<8xf32>
    %41 = vector.multi_reduction <add>, %40, %cst_29 [1] : vector<8x128xf32> to vector<8xf32>
    %42 = vector.shape_cast %41 : vector<8xf32> to vector<8x1xf32>
    %43 = vector.broadcast %42 : vector<8x1xf32> to vector<8x128xf32>
    %44 = arith.divf %40, %43 : vector<8x128xf32>
    %cst_30 = arith.constant 1.11111116 : f32
    %45 = vector.broadcast %cst_30 : f32 to vector<128x128xf32>
    %46 = arith.mulf %10, %45 : vector<128x128xf32>
    %47 = tpu.concatenate %46, %46, %46, %46 in 1 : vector<128x128xf32>, vector<128x128xf32>, vector<128x128xf32>, vector<128x128xf32> -> vector<128x512xf32>
    %c0_31 = arith.constant 0 : index
    %c0_32 = arith.constant 0 : index
    %48 = vector.load %arg3[%c0_31, %c0_32] : memref<128x512xf32, #tpu.memory_space<vmem>>, vector<128x512xf32>
    %cst_33 = arith.constant 1.000000e-01 : f32
    %49 = vector.broadcast %cst_33 : f32 to vector<128x512xf32>
    %50 = arith.cmpf oge, %48, %49 : vector<128x512xf32>
    %cst_34 = arith.constant 0.000000e+00 : f32
    %51 = vector.broadcast %cst_34 : f32 to vector<128x512xf32>
    %52 = arith.select %50, %47, %51 : vector<128x512xi1>, vector<128x512xf32>
    %cst_35 = arith.constant dense<0.000000e+00> : vector<8x512xf32>
    %53 = tpu.matmul %44, %52, %cst_35 {dimension_numbers = #tpu.dot_dimension_numbers<[1], [0], [0], [1], [0, 0, 1, 1], [], []>} : vector<8x128xf32>, vector<128x512xf32>, vector<8x512xf32> -> vector<8x512xf32>
    %54 = vector.extract_strided_slice %53 {offsets = [0, 0], sizes = [8, 128], strides = [1, 1]} : vector<8x512xf32> to vector<8x128xf32>
    %55 = vector.extract_strided_slice %53 {offsets = [0, 128], sizes = [8, 128], strides = [1, 1]} : vector<8x512xf32> to vector<8x128xf32>
    %56 = vector.extract_strided_slice %53 {offsets = [0, 256], sizes = [8, 128], strides = [1, 1]} : vector<8x512xf32> to vector<8x128xf32>
    %57 = vector.extract_strided_slice %53 {offsets = [0, 384], sizes = [8, 128], strides = [1, 1]} : vector<8x512xf32> to vector<8x128xf32>
    %58 = arith.addf %54, %55 : vector<8x128xf32>
    %59 = arith.addf %58, %56 : vector<8x128xf32>
    %60 = arith.addf %59, %57 : vector<8x128xf32>
    %cst_36 = arith.constant 2.500000e-01 : f32
    %61 = vector.broadcast %cst_36 : f32 to vector<8x128xf32>
    %62 = arith.mulf %60, %61 : vector<8x128xf32>
    %63 = arith.subf %54, %62 : vector<8x128xf32>
    %64 = arith.mulf %63, %63 : vector<8x128xf32>
    %65 = arith.subf %55, %62 : vector<8x128xf32>
    %66 = arith.mulf %65, %65 : vector<8x128xf32>
    %67 = arith.addf %64, %66 : vector<8x128xf32>
    %68 = arith.subf %56, %62 : vector<8x128xf32>
    %69 = arith.mulf %68, %68 : vector<8x128xf32>
    %70 = arith.addf %67, %69 : vector<8x128xf32>
    %71 = arith.subf %57, %62 : vector<8x128xf32>
    %72 = arith.mulf %71, %71 : vector<8x128xf32>
    %73 = arith.addf %70, %72 : vector<8x128xf32>
    %cst_37 = arith.constant 2.500000e-01 : f32
    %74 = vector.broadcast %cst_37 : f32 to vector<8x128xf32>
    %75 = arith.mulf %73, %74 : vector<8x128xf32>
    %76 = arith.addf %62, %17 : vector<8x128xf32>
    %c0_38 = arith.constant 0 : index
    %c0_39 = arith.constant 0 : index
    %77 = vector.load %arg9[%c0_38, %c0_39] : memref<8x128xf32, #tpu.memory_space<vmem>>, vector<8x128xf32>
    tpu.vector_store %arg9[%c0_38, %c0_39], %76 {strides = array<i32>} : memref<8x128xf32, #tpu.memory_space<vmem>>, vector<8x128xf32>,
    %c0_40 = arith.constant 0 : index
    %c0_41 = arith.constant 0 : index
    %78 = vector.load %arg10[%c0_40, %c0_41] : memref<8x128xf32, #tpu.memory_space<vmem>>, vector<8x128xf32>
    tpu.vector_store %arg10[%c0_40, %c0_41], %75 {strides = array<i32>} : memref<8x128xf32, #tpu.memory_space<vmem>>, vector<8x128xf32>,
    return
  }
  func.func @transform_0(%arg0: i32) -> (i32, i32) {
    %c0_i32 = arith.constant 0 : i32
    %c0_i32_0 = arith.constant 0 : i32
    %c0_i32_1 = arith.constant 0 : i32
    return %c0_i32, %c0_i32_0 : i32, i32
  }
  func.func @transform_1(%arg0: i32) -> (i32, i32) {
    %c0_i32 = arith.constant 0 : i32
    %c0_i32_0 = arith.constant 0 : i32
    %c0_i32_1 = arith.constant 0 : i32
    return %c0_i32, %c0_i32_0 : i32, i32
  }
  func.func @transform_2(%arg0: i32) -> (i32, i32) {
    %c0_i32 = arith.constant 0 : i32
    %c0_i32_0 = arith.constant 0 : i32
    %c0_i32_1 = arith.constant 0 : i32
    return %c0_i32, %c0_i32_0 : i32, i32
  }
  func.func @transform_3(%arg0: i32) -> (i32, i32) {
    %c0_i32 = arith.constant 0 : i32
    %c0_i32_0 = arith.constant 0 : i32
    %c0_i32_1 = arith.constant 0 : i32
    return %c0_i32, %c0_i32_0 : i32, i32
  }
  func.func @transform_4(%arg0: i32) -> (i32, i32) {
    %c0_i32 = arith.constant 0 : i32
    %c0_i32_0 = arith.constant 0 : i32
    %c0_i32_1 = arith.constant 0 : i32
    return %c0_i32, %c0_i32_0 : i32, i32
  }
  func.func @transform_5(%arg0: i32) -> (i32, i32) {
    %c0_i32 = arith.constant 0 : i32
    %c0_i32_0 = arith.constant 0 : i32
    %c0_i32_1 = arith.constant 0 : i32
    return %c0_i32, %c0_i32_0 : i32, i32
  }
  func.func @transform_6(%arg0: i32) -> (i32, i32) {
    %c0_i32 = arith.constant 0 : i32
    %c0_i32_0 = arith.constant 0 : i32
    %c0_i32_1 = arith.constant 0 : i32
    return %c0_i32, %c0_i32_0 : i32, i32
  }
  func.func @transform_7(%arg0: i32) -> (i32, i32) {
    %c0_i32 = arith.constant 0 : i32
    %c0_i32_0 = arith.constant 0 : i32
    %c0_i32_1 = arith.constant 0 : i32
    return %c0_i32, %c0_i32_0 : i32, i32
  }
  func.func @transform_8(%arg0: i32) -> (i32, i32) {
    %c0_i32 = arith.constant 0 : i32
    %c0_i32_0 = arith.constant 0 : i32
    %c0_i32_1 = arith.constant 0 : i32
    return %c0_i32, %c0_i32_0 : i32, i32
  }
  func.func @transform_9(%arg0: i32) -> (i32, i32) {
    %c0_i32 = arith.constant 0 : i32
    %c0_i32_0 = arith.constant 0 : i32
    %c0_i32_1 = arith.constant 0 : i32
    return %c0_i32, %c0_i32_0 : i32, i32
  }
}

</mosaic_0001>

<llo_original>
// kernel: tpu_custom_call.1
$region0: #{tpu_custom_call.1}
  #allocation0 [shape = 'u32[]', space=smem, size = 0x4, offset = 0x4, fixed_abs, tag = 'smem constant byte address 0x4 - core index']
  #allocation1 [shape = 'u32[72,128]{1,0:T(1,128)}', space=vmem, size = 0x9000, scoped, tag = 'internal scratch']
  #allocation2 [shape = 'f32[128,128]{1,0:T(8,128)}', space=vmem, size = 0x10000, scoped, tag = 'scratch operand']
  %s0 = inlined_call_operand.vmem [shape: s32[8,1], index: 0, kind: input, shape index: {}]
  %s1 = inlined_call_operand.vmem [shape: f32[8,128], index: 1, kind: input, shape index: {}]
  %s2 = inlined_call_operand.hbm [shape: f32[128,512], index: 2, kind: input, shape index: {}]
  %s3 = inlined_call_operand.vmem [shape: f32[2,128], index: 3, kind: input, shape index: {}]
  %s4 = inlined_call_operand.hbm [shape: f32[16,128], index: 4, kind: input, shape index: {}]
  %s5 = inlined_call_operand.hbm [shape: f32[24,128], index: 5, kind: input, shape index: {}]
  %s6 = inlined_call_operand.hbm [shape: f32[128,128], index: 6, kind: input, shape index: {}]
  %s7 = inlined_call_operand.hbm [shape: f32[128,128], index: 7, kind: input, shape index: {}]
  %s8 = inlined_call_operand.hbm [shape: f32[8,128], index: 8, kind: output, shape index: {0}]
  %s9 = inlined_call_operand.hbm [shape: f32[8,128], index: 9, kind: output, shape index: {1}]
  %10 = xla_tuple %s8, %s9
  %s11 = sld [smem:[#allocation0]]
  $region70: #{tpu_custom_call.1} parent=0
    _
  %s13 = ssub.s32 1, %s11
  %s14 = scalar_select 0, %s13, %s11
  $region1: #{tpu_custom_call.1} parent=0
    #allocation3 [shape = 'u8[262144]{0}', space=vmem, size = 0x40000, scoped, tag = 'input window, operand 2, single buffered']
    #allocation4 [shape = 's32[1]{0}', space=sflag, size = 0x4, scoped, tag = 'scoped memory for tpu_custom_call.1']
    #allocation5 [shape = 's32[1]{0}', space=sflag, size = 0x4, scoped, tag = 'scoped memory for tpu_custom_call.1']
    #allocation6 [shape = 'u8[8192]{0}', space=vmem, size = 0x2000, scoped, tag = 'input window, operand 4, single buffered']
    #allocation7 [shape = 's32[1]{0}', space=sflag, size = 0x4, scoped, tag = 'scoped memory for tpu_custom_call.1']
    #allocation8 [shape = 'u8[12288]{0}', space=vmem, size = 0x3000, scoped, tag = 'input window, operand 5, single buffered']
    #allocation9 [shape = 'u8[65536]{0}', space=vmem, size = 0x10000, scoped, tag = 'input window, operand 6, single buffered']
    #allocation10 [shape = 's32[1]{0}', space=sflag, size = 0x4, scoped, tag = 'scoped memory for tpu_custom_call.1']
    #allocation11 [shape = 'u8[65536]{0}', space=vmem, size = 0x10000, scoped, tag = 'input window, operand 7, single buffered']
    #allocation12 [shape = 'u8[4096]{0}', space=vmem, size = 0x1000, scoped, tag = 'output window, operand 0, single buffered']
    #allocation13 [shape = 'u8[4096]{0}', space=vmem, size = 0x1000, scoped, tag = 'output window, operand 1, single buffered']
    #allocation14 [shape = 's32[1]{0}', space=sflag, size = 0x4, scoped, tag = 'scoped memory for tpu_custom_call.1']
    %15 = vsyncpa [#allocation4], 0
    %16 = vsyncpa [#allocation7], 0
    %17 = vsyncpa [#allocation10], 0
    %18 = vsyncpa [#allocation5], 0
    %19 = vsyncpa [#allocation14], 0
    // Predicated region
    $region2: #{tpu_custom_call.1} parent=1 // pred_check
      _
    $region3: #{tpu_custom_call.1} parent=1 // pred_check_branch
      %21 = sbr.rel (0) target = $region5
    $region4: #{tpu_custom_call.1} parent=1 // pred_region
      _
    $region5: #{tpu_custom_call.1} parent=1 // pred_fallthru
      _
    // Predicated region
    $region6: #{tpu_custom_call.1} parent=1 // pred_check
      _
    $region7: #{tpu_custom_call.1} parent=1 // pred_check_branch
      %23 = sbr.rel (0) target = $region9
    $region8: #{tpu_custom_call.1} parent=1 // pred_region
      _
    $region9: #{tpu_custom_call.1} parent=1 // pred_fallthru
      _
    // Predicated region
    $region10: #{tpu_custom_call.1} parent=1 // pred_check
      _
    $region11: #{tpu_custom_call.1} parent=1 // pred_check_branch
      %25 = sbr.rel (0) target = $region13
    $region12: #{tpu_custom_call.1} parent=1 // pred_region
      %27 = vsyncadd [#allocation4], 0
      %s28 = sshll.u32 %s2, 4
      %s29 = int_to_ptr.hbm [resolvable:$true] %s28
      %s30 = sshll.u32 [#allocation3], 4
      %s31 = int_to_ptr.vmem [resolvable:$true] %s30
      %36 = dma.hbm_to_vmem [thread:$0]  %s29, 8192, %s31, [#allocation4], 512, 512, 32
    $region13: #{tpu_custom_call.1} parent=1 // pred_fallthru
      _
    // Predicated region
    $region14: #{tpu_custom_call.1} parent=1 // pred_check
      _
    $region15: #{tpu_custom_call.1} parent=1 // pred_check_branch
      %38 = sbr.rel (0) target = $region17
    $region16: #{tpu_custom_call.1} parent=1 // pred_region
      _
    $region17: #{tpu_custom_call.1} parent=1 // pred_fallthru
      _
    // Predicated region
    $region18: #{tpu_custom_call.1} parent=1 // pred_check
      _
    $region19: #{tpu_custom_call.1} parent=1 // pred_check_branch
      %40 = sbr.rel (0) target = $region21
    $region20: #{tpu_custom_call.1} parent=1 // pred_region
      %42 = vsyncadd [#allocation7], 0
      %s43 = sshll.u32 %s4, 4
      %s44 = int_to_ptr.hbm [resolvable:$true] %s43
      %s45 = sshll.u32 [#allocation6], 4
      %s46 = int_to_ptr.vmem [resolvable:$true] %s45
      %51 = dma.hbm_to_vmem [thread:$0]  %s44, 256, %s46, [#allocation7], 128, 128, 8
    $region21: #{tpu_custom_call.1} parent=1 // pred_fallthru
      _
    // Predicated region
    $region22: #{tpu_custom_call.1} parent=1 // pred_check
      _
    $region23: #{tpu_custom_call.1} parent=1 // pred_check_branch
      %53 = sbr.rel (0) target = $region25
    $region24: #{tpu_custom_call.1} parent=1 // pred_region
      %55 = vsyncadd [#allocation7], 0
      %s56 = sshll.u32 %s5, 4
      %s57 = int_to_ptr.hbm [resolvable:$true] %s56
      %s58 = sshll.u32 [#allocation8], 4
      %s59 = int_to_ptr.vmem [resolvable:$true] %s58
      %64 = dma.hbm_to_vmem [thread:$0]  %s57, 384, %s59, [#allocation7], 128, 128, 8
    $region25: #{tpu_custom_call.1} parent=1 // pred_fallthru
      _
    // Predicated region
    $region26: #{tpu_custom_call.1} parent=1 // pred_check
      _
    $region27: #{tpu_custom_call.1} parent=1 // pred_check_branch
      %66 = sbr.rel (0) target = $region29
    $region28: #{tpu_custom_call.1} parent=1 // pred_region
      %68 = vsyncadd [#allocation10], 0
      %s69 = sshll.u32 %s6, 4
      %s70 = int_to_ptr.hbm [resolvable:$true] %s69
      %s71 = sshll.u32 [#allocation9], 4
      %s72 = int_to_ptr.vmem [resolvable:$true] %s71
      %77 = dma.hbm_to_vmem [thread:$0]  %s70, 2048, %s72, [#allocation10], 128, 128, 8
    $region29: #{tpu_custom_call.1} parent=1 // pred_fallthru
      _
    // Predicated region
    $region30: #{tpu_custom_call.1} parent=1 // pred_check
      _
    $region31: #{tpu_custom_call.1} parent=1 // pred_check_branch
      %79 = sbr.rel (0) target = $region33
    $region32: #{tpu_custom_call.1} parent=1 // pred_region
      %81 = vsyncadd [#allocation10], 0
      %s82 = sshll.u32 %s7, 4
      %s83 = int_to_ptr.hbm [resolvable:$true] %s82
      %s84 = sshll.u32 [#allocation11], 4
      %s85 = int_to_ptr.vmem [resolvable:$true] %s84
      %90 = dma.hbm_to_vmem [thread:$0]  %s83, 2048, %s85, [#allocation10], 128, 128, 8
    $region33: #{tpu_custom_call.1} parent=1 // pred_fallthru
      _
    // Predicated region
    $region34: #{tpu_custom_call.1} parent=1 // pred_check
      _
    $region35: #{tpu_custom_call.1} parent=1 // pred_check_branch
      %92 = sbr.rel (0) target = $region37
    $region36: #{tpu_custom_call.1} parent=1 // pred_region
      %94 = dma.done [#allocation4], 8192
    $region37: #{tpu_custom_call.1} parent=1 // pred_fallthru
      _
    // Predicated region
    $region38: #{tpu_custom_call.1} parent=1 // pred_check
      _
    $region39: #{tpu_custom_call.1} parent=1 // pred_check_branch
      %96 = sbr.rel (0) target = $region41
    $region40: #{tpu_custom_call.1} parent=1 // pred_region
      %98 = dma.done [#allocation7], 256
    $region41: #{tpu_custom_call.1} parent=1 // pred_fallthru
      _
    // Predicated region
    $region42: #{tpu_custom_call.1} parent=1 // pred_check
      _
    $region43: #{tpu_custom_call.1} parent=1 // pred_check_branch
      %100 = sbr.rel (0) target = $region45
    $region44: #{tpu_custom_call.1} parent=1 // pred_region
      %102 = dma.done [#allocation7], 384
    $region45: #{tpu_custom_call.1} parent=1 // pred_fallthru
      _
    // Predicated region
    $region46: #{tpu_custom_call.1} parent=1 // pred_check
      _
    $region47: #{tpu_custom_call.1} parent=1 // pred_check_branch
      %104 = sbr.rel (0) target = $region49
    $region48: #{tpu_custom_call.1} parent=1 // pred_region
      %106 = dma.done [#allocation10], 2048
    $region49: #{tpu_custom_call.1} parent=1 // pred_fallthru
      _
    // Predicated region
    $region50: #{tpu_custom_call.1} parent=1 // pred_check
      _
    $region51: #{tpu_custom_call.1} parent=1 // pred_check_branch
      %108 = sbr.rel (0) target = $region53
    $region52: #{tpu_custom_call.1} parent=1 // pred_region
      %110 = dma.done [#allocation10], 2048
    $region53: #{tpu_custom_call.1} parent=1 // pred_fallthru
      _
    %111 = vst [vmem:[#allocation2] sm:$0xff] 0.0
    %112 = vst [vmem:[#allocation2 + $0x8] sm:$0xff] 0.0
    %113 = vst [vmem:[#allocation2 + $0x10] sm:$0xff] 0.0
    %114 = vst [vmem:[#allocation2 + $0x18] sm:$0xff] 0.0
    %115 = vst [vmem:[#allocation2 + $0x20] sm:$0xff] 0.0
    %116 = vst [vmem:[#allocation2 + $0x28] sm:$0xff] 0.0
    %117 = vst [vmem:[#allocation2 + $0x30] sm:$0xff] 0.0
    %118 = vst [vmem:[#allocation2 + $0x38] sm:$0xff] 0.0
    %119 = vst [vmem:[#allocation2 + $0x40] sm:$0xff] 0.0
    %120 = vst [vmem:[#allocation2 + $0x48] sm:$0xff] 0.0
    %121 = vst [vmem:[#allocation2 + $0x50] sm:$0xff] 0.0
    %122 = vst [vmem:[#allocation2 + $0x58] sm:$0xff] 0.0
    %123 = vst [vmem:[#allocation2 + $0x60] sm:$0xff] 0.0
    %124 = vst [vmem:[#allocation2 + $0x68] sm:$0xff] 0.0
    %125 = vst [vmem:[#allocation2 + $0x70] sm:$0xff] 0.0
    %126 = vst [vmem:[#allocation2 + $0x78] sm:$0xff] 0.0
    %v127 = vld [vmem:[#allocation6] sm:$0xff]
    %v128 = vld [vmem:[#allocation6 + $0x8] sm:$0xff]
    %v129 = vld [vmem:[#allocation9] sm:$0xff]
    %v130 = vld [vmem:[#allocation9 + $0x8] sm:$0xff]
    %v131 = vld [vmem:[#allocation9 + $0x10] sm:$0xff]
    %v132 = vld [vmem:[#allocation9 + $0x18] sm:$0xff]
    %v133 = vld [vmem:[#allocation9 + $0x20] sm:$0xff]
    %v134 = vld [vmem:[#allocation9 + $0x28] sm:$0xff]
    %v135 = vld [vmem:[#allocation9 + $0x30] sm:$0xff]
    %v136 = vld [vmem:[#allocation9 + $0x38] sm:$0xff]
    %v137 = vld [vmem:[#allocation9 + $0x40] sm:$0xff]
    %v138 = vld [vmem:[#allocation9 + $0x48] sm:$0xff]
    %v139 = vld [vmem:[#allocation9 + $0x50] sm:$0xff]
    %v140 = vld [vmem:[#allocation9 + $0x58] sm:$0xff]
    %v141 = vld [vmem:[#allocation9 + $0x60] sm:$0xff]
    %v142 = vld [vmem:[#allocation9 + $0x68] sm:$0xff]
    %v143 = vld [vmem:[#allocation9 + $0x70] sm:$0xff]
    %v144 = vld [vmem:[#allocation9 + $0x78] sm:$0xff]
    %145 = vmatpush.msra.mxu0 %v144
    %146 = vmatpush.msra.mxu0 %v143
    %147 = vmatpush.msra.mxu0 %v142
    %148 = vmatpush.msra.mxu0 %v141
    %149 = vmatpush.msra.mxu0 %v140
    %150 = vmatpush.msra.mxu0 %v139
    %151 = vmatpush.msra.mxu0 %v138
    %152 = vmatpush.msra.mxu0 %v137
    %153 = vmatpush.msra.mxu0 %v136
    %154 = vmatpush.msra.mxu0 %v135
    %155 = vmatpush.msra.mxu0 %v134
    %156 = vmatpush.msra.mxu0 %v133
    %157 = vmatpush.msra.mxu0 %v132
    %158 = vmatpush.msra.mxu0 %v131
    %159 = vmatpush.msra.mxu0 %v130
    %160 = vmatpush.msra.mxu0 %v129
    %161 = vmatmul.f32.gmra.mxu0 %v127
    %v162 = vpop.f32.mrf.mxu0
    %v163 = vadd.f32 0.0, %v162
    %164 = vmatmul.f32.gmra.mxu0 %v128
    %v165 = vpop.f32.mrf.mxu0
    %v166 = vadd.f32 0.0, %v165
    %167 = vdwg.mxu0
    %168 = vst [vmem:[#allocation2] sm:$0xff] %v163
    %169 = vst [vmem:[#allocation2 + $0x8] sm:$0xff] %v166
    %v170 = vld [vmem:[#allocation8] sm:$0xff]
    %v171 = vld [vmem:[#allocation8 + $0x8] sm:$0xff]
    %v172 = vld [vmem:[#allocation8 + $0x10] sm:$0xff]
    %v173 = vld [vmem:[#allocation11] sm:$0xff]
    %v174 = vld [vmem:[#allocation11 + $0x8] sm:$0xff]
    %v175 = vld [vmem:[#allocation11 + $0x10] sm:$0xff]
    %v176 = vld [vmem:[#allocation11 + $0x18] sm:$0xff]
    %v177 = vld [vmem:[#allocation11 + $0x20] sm:$0xff]
    %v178 = vld [vmem:[#allocation11 + $0x28] sm:$0xff]
    %v179 = vld [vmem:[#allocation11 + $0x30] sm:$0xff]
    %v180 = vld [vmem:[#allocation11 + $0x38] sm:$0xff]
    %v181 = vld [vmem:[#allocation11 + $0x40] sm:$0xff]
    %v182 = vld [vmem:[#allocation11 + $0x48] sm:$0xff]
    %v183 = vld [vmem:[#allocation11 + $0x50] sm:$0xff]
    %v184 = vld [vmem:[#allocation11 + $0x58] sm:$0xff]
    %v185 = vld [vmem:[#allocation11 + $0x60] sm:$0xff]
    %v186 = vld [vmem:[#allocation11 + $0x68] sm:$0xff]
    %v187 = vld [vmem:[#allocation11 + $0x70] sm:$0xff]
    %v188 = vld [vmem:[#allocation11 + $0x78] sm:$0xff]
    %189 = vmatpush.msra.mxu0 %v188
    %190 = vmatpush.msra.mxu0 %v187
    %191 = vmatpush.msra.mxu0 %v186
    %192 = vmatpush.msra.mxu0 %v185
    %193 = vmatpush.msra.mxu0 %v184
    %194 = vmatpush.msra.mxu0 %v183
    %195 = vmatpush.msra.mxu0 %v182
    %196 = vmatpush.msra.mxu0 %v181
    %197 = vmatpush.msra.mxu0 %v180
    %198 = vmatpush.msra.mxu0 %v179
    %199 = vmatpush.msra.mxu0 %v178
    %200 = vmatpush.msra.mxu0 %v177
    %201 = vmatpush.msra.mxu0 %v176
    %202 = vmatpush.msra.mxu0 %v175
    %203 = vmatpush.msra.mxu0 %v174
    %204 = vmatpush.msra.mxu0 %v173
    %205 = vmatmul.f32.gmra.mxu0 %v170
    %v206 = vpop.f32.mrf.mxu0
    %v207 = vadd.f32 0.0, %v206
    %208 = vmatmul.f32.gmra.mxu0 %v171
    %v209 = vpop.f32.mrf.mxu0
    %v210 = vadd.f32 0.0, %v209
    %211 = vmatmul.f32.gmra.mxu0 %v172
    %v212 = vpop.f32.mrf.mxu0
    %v213 = vadd.f32 0.0, %v212
    %214 = vdwg.mxu0
    %215 = vst [vmem:[#allocation2 + $0x10] sm:$0xff] %v207
    %216 = vst [vmem:[#allocation2 + $0x18] sm:$0xff] %v210
    %217 = vst [vmem:[#allocation2 + $0x20] sm:$0xff] %v213
    %v218 = vld [vmem:[#allocation2] sm:$0xff]
    %v219 = vld [vmem:[#allocation2 + $0x8] sm:$0xff]
    %v220 = vld [vmem:[#allocation2 + $0x10] sm:$0xff]
    %v221 = vld [vmem:[#allocation2 + $0x18] sm:$0xff]
    %v222 = vld [vmem:[#allocation2 + $0x20] sm:$0xff]
    %v223 = vld [vmem:[#allocation2 + $0x28] sm:$0xff]
    %v224 = vld [vmem:[#allocation2 + $0x30] sm:$0xff]
    %v225 = vld [vmem:[#allocation2 + $0x38] sm:$0xff]
    %v226 = vld [vmem:[#allocation2 + $0x40] sm:$0xff]
    %v227 = vld [vmem:[#allocation2 + $0x48] sm:$0xff]
    %v228 = vld [vmem:[#allocation2 + $0x50] sm:$0xff]
    %v229 = vld [vmem:[#allocation2 + $0x58] sm:$0xff]
    %v230 = vld [vmem:[#allocation2 + $0x60] sm:$0xff]
    %v231 = vld [vmem:[#allocation2 + $0x68] sm:$0xff]
    %v232 = vld [vmem:[#allocation2 + $0x70] sm:$0xff]
    %v233 = vld [vmem:[#allocation2 + $0x78] sm:$0xff]
    %v234 = vlaneseq
    %v235 = vand.u32 %v234, 127
    %v236 = vld [vmem:[%s0] sm:$0xff]
    %237 = vset.pattern.permute.xlu0 0
    %238 = vperm.xlu0 %237, %v236
    %v239 = vpop.permute.xlu0 %238
    %vm240 = vcmp.eq.s32.totalorder %v235, %v239
    %v241 = vsel %vm240, 1, 0
    %v242 = vcvt.s32.f32 %v241
    %243 = vmatpush.msra.mxu0 %v233
    %244 = vmatpush.msra.mxu0 %v232
    %245 = vmatpush.msra.mxu0 %v231
    %246 = vmatpush.msra.mxu0 %v230
    %247 = vmatpush.msra.mxu0 %v229
    %248 = vmatpush.msra.mxu0 %v228
    %249 = vmatpush.msra.mxu0 %v227
    %250 = vmatpush.msra.mxu0 %v226
    %251 = vmatpush.msra.mxu0 %v225
    %252 = vmatpush.msra.mxu0 %v224
    %253 = vmatpush.msra.mxu0 %v223
    %254 = vmatpush.msra.mxu0 %v222
    %255 = vmatpush.msra.mxu0 %v221
    %256 = vmatpush.msra.mxu0 %v220
    %257 = vmatpush.msra.mxu0 %v219
    %258 = vmatpush.msra.mxu0 %v218
    %259 = vmatmul.f32.gmra.mxu0 %v242
    %v260 = vpop.f32.mrf.mxu0
    %v261 = vadd.f32 0.0, %v260
    %262 = vdwg.mxu0
    %v263 = vld [vmem:[%s3] sm:$0x3]
    %264 = vmatpush.xpose.msra.mxu0 %v233
    %265 = vmatpush.xpose.msra.mxu0 %v232
    %266 = vmatpush.xpose.msra.mxu0 %v231
    %267 = vmatpush.xpose.msra.mxu0 %v230
    %268 = vmatpush.xpose.msra.mxu0 %v229
    %269 = vmatpush.xpose.msra.mxu0 %v228
    %270 = vmatpush.xpose.msra.mxu0 %v227
    %271 = vmatpush.xpose.msra.mxu0 %v226
    %272 = vmatpush.xpose.msra.mxu0 %v225
    %273 = vmatpush.xpose.msra.mxu0 %v224
    %274 = vmatpush.xpose.msra.mxu0 %v223
    %275 = vmatpush.xpose.msra.mxu0 %v222
    %276 = vmatpush.xpose.msra.mxu0 %v221
    %277 = vmatpush.xpose.msra.mxu0 %v220
    %278 = vmatpush.xpose.msra.mxu0 %v219
    %279 = vmatpush.xpose.msra.mxu0 %v218
    %280 = vmatmul.f32.gmra.mxu0 %v263
    %v281 = vpop.f32.mrf.mxu0
    %v282 = vadd.f32 0.0, %v281
    %283 = vdwg.mxu0
    %v284 = vperm.slane %v282, 0
    %v285 = vmul.f32 %v242, %v284
    %286 = vadd.xlane.f32.xlu0 %v285
    %v287 = vpop.xlane.xlu0 %286
    %v288 = vld [vmem:[%s1] sm:$0xff]
    %vm289 = vcmp.ne.f32.partialorder %v288, 0.0
    %v290 = vsel %vm289, 0.0, -1e+30
    %v291 = vperm.slane %v282, 1
    %v292 = vadd.f32 %v287, %v291
    %v293 = vadd.f32 %v292, %v290
    %294 = vmax.xlane.f32.xlu0 %v293
    %v295 = vpop.xlane.xlu0 %294
    %v296 = vsub.f32 %v293, %v295
    %v297 = vmul.f32 %v296, 1.442695
    %v298 = vpow.pop %v297
    %299 = vadd.xlane.f32.xlu0 %v298
    %v300 = vpop.xlane.xlu0 %299
    %v301 = vrcp.pop %v300
    %v302 = vmul.f32 %v300, %v301
    %v303 = vsub.f32 1.0, %v302
    %v304 = vmul.f32 %v301, %v303
    %v305 = vadd.f32 %v301, %v304
    %vm306 = vweird.f32 %v300
    %vm307 = vweird.f32 %v301
    %vm308 = vmor %vm306, %vm307
    %v309 = vsel %vm308, %v301, %v305
    %v310 = vand.u32 2147483647, %v300
    %vm311 = vcmp.eq.f32.partialorder %v310, 8.507059e+37
    %v312 = vand.u32 %v300, 2147483648
    %v313 = vor.u32 1.1754944e-38, %v312
    %v314 = vsel %vm311, %v313, %v309
    %v315 = vmul.f32 %v298, %v314
    %v316 = vmul.f32 %v218, 1.1111112
    %v317 = vmul.f32 %v219, 1.1111112
    %v318 = vmul.f32 %v220, 1.1111112
    %v319 = vmul.f32 %v221, 1.1111112
    %v320 = vmul.f32 %v222, 1.1111112
    %v321 = vmul.f32 %v223, 1.1111112
    %v322 = vmul.f32 %v224, 1.1111112
    %v323 = vmul.f32 %v225, 1.1111112
    %v324 = vmul.f32 %v226, 1.1111112
    %v325 = vmul.f32 %v227, 1.1111112
    %v326 = vmul.f32 %v228, 1.1111112
    %v327 = vmul.f32 %v229, 1.1111112
    %v328 = vmul.f32 %v230, 1.1111112
    %v329 = vmul.f32 %v231, 1.1111112
    %v330 = vmul.f32 %v232, 1.1111112
    %v331 = vmul.f32 %v233, 1.1111112
    %v332 = vld [vmem:[#allocation3] sm:$0xff]
    %v333 = vld [vmem:[#allocation3 + $0x8] sm:$0xff]
    %v334 = vld [vmem:[#allocation3 + $0x10] sm:$0xff]
    %v335 = vld [vmem:[#allocation3 + $0x18] sm:$0xff]
    %v336 = vld [vmem:[#allocation3 + $0x20] sm:$0xff]
    %v337 = vld [vmem:[#allocation3 + $0x28] sm:$0xff]
    %v338 = vld [vmem:[#allocation3 + $0x30] sm:$0xff]
    %v339 = vld [vmem:[#allocation3 + $0x38] sm:$0xff]
    %v340 = vld [vmem:[#allocation3 + $0x40] sm:$0xff]
    %v341 = vld [vmem:[#allocation3 + $0x48] sm:$0xff]
    %v342 = vld [vmem:[#allocation3 + $0x50] sm:$0xff]
    %v343 = vld [vmem:[#allocation3 + $0x58] sm:$0xff]
    %v344 = vld [vmem:[#allocation3 + $0x60] sm:$0xff]
    %v345 = vld [vmem:[#allocation3 + $0x68] sm:$0xff]
    %v346 = vld [vmem:[#allocation3 + $0x70] sm:$0xff]
    %v347 = vld [vmem:[#allocation3 + $0x78] sm:$0xff]
    %v348 = vld [vmem:[#allocation3 + $0x80] sm:$0xff]
    %v349 = vld [vmem:[#allocation3 + $0x88] sm:$0xff]
    %v350 = vld [vmem:[#allocation3 + $0x90] sm:$0xff]
    %v351 = vld [vmem:[#allocation3 + $0x98] sm:$0xff]
    %v352 = vld [vmem:[#allocation3 + $0xa0] sm:$0xff]
    %v353 = vld [vmem:[#allocation3 + $0xa8] sm:$0xff]
    %v354 = vld [vmem:[#allocation3 + $0xb0] sm:$0xff]
    %v355 = vld [vmem:[#allocation3 + $0xb8] sm:$0xff]
    %v356 = vld [vmem:[#allocation3 + $0xc0] sm:$0xff]
    %v357 = vld [vmem:[#allocation3 + $0xc8] sm:$0xff]
    %v358 = vld [vmem:[#allocation3 + $0xd0] sm:$0xff]
    %v359 = vld [vmem:[#allocation3 + $0xd8] sm:$0xff]
    %v360 = vld [vmem:[#allocation3 + $0xe0] sm:$0xff]
    %v361 = vld [vmem:[#allocation3 + $0xe8] sm:$0xff]
    %v362 = vld [vmem:[#allocation3 + $0xf0] sm:$0xff]
    %v363 = vld [vmem:[#allocation3 + $0xf8] sm:$0xff]
    %v364 = vld [vmem:[#allocation3 + $0x100] sm:$0xff]
    %v365 = vld [vmem:[#allocation3 + $0x108] sm:$0xff]
    %v366 = vld [vmem:[#allocation3 + $0x110] sm:$0xff]
    %v367 = vld [vmem:[#allocation3 + $0x118] sm:$0xff]
    %v368 = vld [vmem:[#allocation3 + $0x120] sm:$0xff]
    %v369 = vld [vmem:[#allocation3 + $0x128] sm:$0xff]
    %v370 = vld [vmem:[#allocation3 + $0x130] sm:$0xff]
    %v371 = vld [vmem:[#allocation3 + $0x138] sm:$0xff]
    %v372 = vld [vmem:[#allocation3 + $0x140] sm:$0xff]
    %v373 = vld [vmem:[#allocation3 + $0x148] sm:$0xff]
    %v374 = vld [vmem:[#allocation3 + $0x150] sm:$0xff]
    %v375 = vld [vmem:[#allocation3 + $0x158] sm:$0xff]
    %v376 = vld [vmem:[#allocation3 + $0x160] sm:$0xff]
    %v377 = vld [vmem:[#allocation3 + $0x168] sm:$0xff]
    %v378 = vld [vmem:[#allocation3 + $0x170] sm:$0xff]
    %v379 = vld [vmem:[#allocation3 + $0x178] sm:$0xff]
    %v380 = vld [vmem:[#allocation3 + $0x180] sm:$0xff]
    %v381 = vld [vmem:[#allocation3 + $0x188] sm:$0xff]
    %v382 = vld [vmem:[#allocation3 + $0x190] sm:$0xff]
    %v383 = vld [vmem:[#allocation3 + $0x198] sm:$0xff]
    %v384 = vld [vmem:[#allocation3 + $0x1a0] sm:$0xff]
    %v385 = vld [vmem:[#allocation3 + $0x1a8] sm:$0xff]
    %v386 = vld [vmem:[#allocation3 + $0x1b0] sm:$0xff]
    %v387 = vld [vmem:[#allocation3 + $0x1b8] sm:$0xff]
    %v388 = vld [vmem:[#allocation3 + $0x1c0] sm:$0xff]
    %v389 = vld [vmem:[#allocation3 + $0x1c8] sm:$0xff]
    %v390 = vld [vmem:[#allocation3 + $0x1d0] sm:$0xff]
    %v391 = vld [vmem:[#allocation3 + $0x1d8] sm:$0xff]
    %v392 = vld [vmem:[#allocation3 + $0x1e0] sm:$0xff]
    %v393 = vld [vmem:[#allocation3 + $0x1e8] sm:$0xff]
    %v394 = vld [vmem:[#allocation3 + $0x1f0] sm:$0xff]
    %v395 = vld [vmem:[#allocation3 + $0x1f8] sm:$0xff]
    %vm396 = vcmp.ge.f32.partialorder %v332, 0.1
    %vm397 = vcmp.ge.f32.partialorder %v333, 0.1
    %vm398 = vcmp.ge.f32.partialorder %v334, 0.1
    %vm399 = vcmp.ge.f32.partialorder %v335, 0.1
    %vm400 = vcmp.ge.f32.partialorder %v336, 0.1
    %vm401 = vcmp.ge.f32.partialorder %v337, 0.1
    %vm402 = vcmp.ge.f32.partialorder %v338, 0.1
    %vm403 = vcmp.ge.f32.partialorder %v339, 0.1
    %vm404 = vcmp.ge.f32.partialorder %v340, 0.1
    %vm405 = vcmp.ge.f32.partialorder %v341, 0.1
    %vm406 = vcmp.ge.f32.partialorder %v342, 0.1
    %vm407 = vcmp.ge.f32.partialorder %v343, 0.1
    %vm408 = vcmp.ge.f32.partialorder %v344, 0.1
    %vm409 = vcmp.ge.f32.partialorder %v345, 0.1
    %vm410 = vcmp.ge.f32.partialorder %v346, 0.1
    %vm411 = vcmp.ge.f32.partialorder %v347, 0.1
    %vm412 = vcmp.ge.f32.partialorder %v348, 0.1
    %vm413 = vcmp.ge.f32.partialorder %v349, 0.1
    %vm414 = vcmp.ge.f32.partialorder %v350, 0.1
    %vm415 = vcmp.ge.f32.partialorder %v351, 0.1
    %vm416 = vcmp.ge.f32.partialorder %v352, 0.1
    %vm417 = vcmp.ge.f32.partialorder %v353, 0.1
    %vm418 = vcmp.ge.f32.partialorder %v354, 0.1
    %vm419 = vcmp.ge.f32.partialorder %v355, 0.1
    %vm420 = vcmp.ge.f32.partialorder %v356, 0.1
    %vm421 = vcmp.ge.f32.partialorder %v357, 0.1
    %vm422 = vcmp.ge.f32.partialorder %v358, 0.1
    %vm423 = vcmp.ge.f32.partialorder %v359, 0.1
    %vm424 = vcmp.ge.f32.partialorder %v360, 0.1
    %vm425 = vcmp.ge.f32.partialorder %v361, 0.1
    %vm426 = vcmp.ge.f32.partialorder %v362, 0.1
    %vm427 = vcmp.ge.f32.partialorder %v363, 0.1
    %vm428 = vcmp.ge.f32.partialorder %v364, 0.1
    %vm429 = vcmp.ge.f32.partialorder %v365, 0.1
    %vm430 = vcmp.ge.f32.partialorder %v366, 0.1
    %vm431 = vcmp.ge.f32.partialorder %v367, 0.1
    %vm432 = vcmp.ge.f32.partialorder %v368, 0.1
    %vm433 = vcmp.ge.f32.partialorder %v369, 0.1
    %vm434 = vcmp.ge.f32.partialorder %v370, 0.1
    %vm435 = vcmp.ge.f32.partialorder %v371, 0.1
    %vm436 = vcmp.ge.f32.partialorder %v372, 0.1
    %vm437 = vcmp.ge.f32.partialorder %v373, 0.1
    %vm438 = vcmp.ge.f32.partialorder %v374, 0.1
    %vm439 = vcmp.ge.f32.partialorder %v375, 0.1
    %vm440 = vcmp.ge.f32.partialorder %v376, 0.1
    %vm441 = vcmp.ge.f32.partialorder %v377, 0.1
    %vm442 = vcmp.ge.f32.partialorder %v378, 0.1
    %vm443 = vcmp.ge.f32.partialorder %v379, 0.1
    %vm444 = vcmp.ge.f32.partialorder %v380, 0.1
    %vm445 = vcmp.ge.f32.partialorder %v381, 0.1
    %vm446 = vcmp.ge.f32.partialorder %v382, 0.1
    %vm447 = vcmp.ge.f32.partialorder %v383, 0.1
    %vm448 = vcmp.ge.f32.partialorder %v384, 0.1
    %vm449 = vcmp.ge.f32.partialorder %v385, 0.1
    %vm450 = vcmp.ge.f32.partialorder %v386, 0.1
    %vm451 = vcmp.ge.f32.partialorder %v387, 0.1
    %vm452 = vcmp.ge.f32.partialorder %v388, 0.1
    %vm453 = vcmp.ge.f32.partialorder %v389, 0.1
    %vm454 = vcmp.ge.f32.partialorder %v390, 0.1
    %vm455 = vcmp.ge.f32.partialorder %v391, 0.1
    %vm456 = vcmp.ge.f32.partialorder %v392, 0.1
    %vm457 = vcmp.ge.f32.partialorder %v393, 0.1
    %vm458 = vcmp.ge.f32.partialorder %v394, 0.1
    %vm459 = vcmp.ge.f32.partialorder %v395, 0.1
    %v460 = vsel %vm396, %v316, 0.0
    %v461 = vsel %vm397, %v316, 0.0
    %v462 = vsel %vm398, %v316, 0.0
    %v463 = vsel %vm399, %v316, 0.0
    %v464 = vsel %vm400, %v317, 0.0
    %v465 = vsel %vm401, %v317, 0.0
    %v466 = vsel %vm402, %v317, 0.0
    %v467 = vsel %vm403, %v317, 0.0
    %v468 = vsel %vm404, %v318, 0.0
    %v469 = vsel %vm405, %v318, 0.0
    %v470 = vsel %vm406, %v318, 0.0
    %v471 = vsel %vm407, %v318, 0.0
    %v472 = vsel %vm408, %v319, 0.0
    %v473 = vsel %vm409, %v319, 0.0
    %v474 = vsel %vm410, %v319, 0.0
    %v475 = vsel %vm411, %v319, 0.0
    %v476 = vsel %vm412, %v320, 0.0
    %v477 = vsel %vm413, %v320, 0.0
    %v478 = vsel %vm414, %v320, 0.0
    %v479 = vsel %vm415, %v320, 0.0
    %v480 = vsel %vm416, %v321, 0.0
    %v481 = vsel %vm417, %v321, 0.0
    %v482 = vsel %vm418, %v321, 0.0
    %v483 = vsel %vm419, %v321, 0.0
    %v484 = vsel %vm420, %v322, 0.0
    %v485 = vsel %vm421, %v322, 0.0
    %v486 = vsel %vm422, %v322, 0.0
    %v487 = vsel %vm423, %v322, 0.0
    %v488 = vsel %vm424, %v323, 0.0
    %v489 = vsel %vm425, %v323, 0.0
    %v490 = vsel %vm426, %v323, 0.0
    %v491 = vsel %vm427, %v323, 0.0
    %v492 = vsel %vm428, %v324, 0.0
    %v493 = vsel %vm429, %v324, 0.0
    %v494 = vsel %vm430, %v324, 0.0
    %v495 = vsel %vm431, %v324, 0.0
    %v496 = vsel %vm432, %v325, 0.0
    %v497 = vsel %vm433, %v325, 0.0
    %v498 = vsel %vm434, %v325, 0.0
    %v499 = vsel %vm435, %v325, 0.0
    %v500 = vsel %vm436, %v326, 0.0
    %v501 = vsel %vm437, %v326, 0.0
    %v502 = vsel %vm438, %v326, 0.0
    %v503 = vsel %vm439, %v326, 0.0
    %v504 = vsel %vm440, %v327, 0.0
    %v505 = vsel %vm441, %v327, 0.0
    %v506 = vsel %vm442, %v327, 0.0
    %v507 = vsel %vm443, %v327, 0.0
    %v508 = vsel %vm444, %v328, 0.0
    %v509 = vsel %vm445, %v328, 0.0
    %v510 = vsel %vm446, %v328, 0.0
    %v511 = vsel %vm447, %v328, 0.0
    %v512 = vsel %vm448, %v329, 0.0
    %v513 = vsel %vm449, %v329, 0.0
    %v514 = vsel %vm450, %v329, 0.0
    %v515 = vsel %vm451, %v329, 0.0
    %v516 = vsel %vm452, %v330, 0.0
    %v517 = vsel %vm453, %v330, 0.0
    %v518 = vsel %vm454, %v330, 0.0
    %v519 = vsel %vm455, %v330, 0.0
    %v520 = vsel %vm456, %v331, 0.0
    %v521 = vsel %vm457, %v331, 0.0
    %v522 = vsel %vm458, %v331, 0.0
    %v523 = vsel %vm459, %v331, 0.0
    %524 = vmatpush.msra.mxu0 %v520
    %525 = vmatpush.msra.mxu0 %v516
    %526 = vmatpush.msra.mxu0 %v512
    %527 = vmatpush.msra.mxu0 %v508
    %528 = vmatpush.msra.mxu0 %v504
    %529 = vmatpush.msra.mxu0 %v500
    %530 = vmatpush.msra.mxu0 %v496
    %531 = vmatpush.msra.mxu0 %v492
    %532 = vmatpush.msra.mxu0 %v488
    %533 = vmatpush.msra.mxu0 %v484
    %534 = vmatpush.msra.mxu0 %v480
    %535 = vmatpush.msra.mxu0 %v476
    %536 = vmatpush.msra.mxu0 %v472
    %537 = vmatpush.msra.mxu0 %v468
    %538 = vmatpush.msra.mxu0 %v464
    %539 = vmatpush.msra.mxu0 %v460
    %540 = vmatmul.f32.gmra.mxu0 %v315
    %v541 = vpop.f32.mrf.mxu0
    %v542 = vadd.f32 0.0, %v541
    %543 = vdwg.mxu0
    %544 = vmatpush.msra.mxu0 %v521
    %545 = vmatpush.msra.mxu0 %v517
    %546 = vmatpush.msra.mxu0 %v513
    %547 = vmatpush.msra.mxu0 %v509
    %548 = vmatpush.msra.mxu0 %v505
    %549 = vmatpush.msra.mxu0 %v501
    %550 = vmatpush.msra.mxu0 %v497
    %551 = vmatpush.msra.mxu0 %v493
    %552 = vmatpush.msra.mxu0 %v489
    %553 = vmatpush.msra.mxu0 %v485
    %554 = vmatpush.msra.mxu0 %v481
    %555 = vmatpush.msra.mxu0 %v477
    %556 = vmatpush.msra.mxu0 %v473
    %557 = vmatpush.msra.mxu0 %v469
    %558 = vmatpush.msra.mxu0 %v465
    %559 = vmatpush.msra.mxu0 %v461
    %560 = vmatmul.f32.gmra.mxu0 %v315
    %v561 = vpop.f32.mrf.mxu0
    %v562 = vadd.f32 0.0, %v561
    %563 = vdwg.mxu0
    %564 = vmatpush.msra.mxu0 %v522
    %565 = vmatpush.msra.mxu0 %v518
    %566 = vmatpush.msra.mxu0 %v514
    %567 = vmatpush.msra.mxu0 %v510
    %568 = vmatpush.msra.mxu0 %v506
    %569 = vmatpush.msra.mxu0 %v502
    %570 = vmatpush.msra.mxu0 %v498
    %571 = vmatpush.msra.mxu0 %v494
    %572 = vmatpush.msra.mxu0 %v490
    %573 = vmatpush.msra.mxu0 %v486
    %574 = vmatpush.msra.mxu0 %v482
    %575 = vmatpush.msra.mxu0 %v478
    %576 = vmatpush.msra.mxu0 %v474
    %577 = vmatpush.msra.mxu0 %v470
    %578 = vmatpush.msra.mxu0 %v466
    %579 = vmatpush.msra.mxu0 %v462
    %580 = vmatmul.f32.gmra.mxu0 %v315
    %v581 = vpop.f32.mrf.mxu0
    %v582 = vadd.f32 0.0, %v581
    %583 = vdwg.mxu0
    %584 = vmatpush.msra.mxu0 %v523
    %585 = vmatpush.msra.mxu0 %v519
    %586 = vmatpush.msra.mxu0 %v515
    %587 = vmatpush.msra.mxu0 %v511
    %588 = vmatpush.msra.mxu0 %v507
    %589 = vmatpush.msra.mxu0 %v503
    %590 = vmatpush.msra.mxu0 %v499
    %591 = vmatpush.msra.mxu0 %v495
    %592 = vmatpush.msra.mxu0 %v491
    %593 = vmatpush.msra.mxu0 %v487
    %594 = vmatpush.msra.mxu0 %v483
    %595 = vmatpush.msra.mxu0 %v479
    %596 = vmatpush.msra.mxu0 %v475
    %597 = vmatpush.msra.mxu0 %v471
    %598 = vmatpush.msra.mxu0 %v467
    %599 = vmatpush.msra.mxu0 %v463
    %600 = vmatmul.f32.gmra.mxu0 %v315
    %v601 = vpop.f32.mrf.mxu0
    %v602 = vadd.f32 0.0, %v601
    %603 = vdwg.mxu0
    %v604 = vadd.f32 %v542, %v562
    %v605 = vadd.f32 %v604, %v582
    %v606 = vadd.f32 %v605, %v602
    %v607 = vmul.f32 %v606, 0.25
    %v608 = vsub.f32 %v542, %v607
    %v609 = vmul.f32 %v608, %v608
    %v610 = vsub.f32 %v562, %v607
    %v611 = vmul.f32 %v610, %v610
    %v612 = vadd.f32 %v609, %v611
    %v613 = vsub.f32 %v582, %v607
    %v614 = vmul.f32 %v613, %v613
    %v615 = vadd.f32 %v612, %v614
    %v616 = vsub.f32 %v602, %v607
    %v617 = vmul.f32 %v616, %v616
    %v618 = vadd.f32 %v615, %v617
    %v619 = vmul.f32 %v618, 0.25
    %v620 = vadd.f32 %v607, %v261
    %621 = vst [vmem:[#allocation12] sm:$0xff] %v620
    %622 = vst [vmem:[#allocation13] sm:$0xff] %v619
    // Predicated region
    $region54: #{tpu_custom_call.1} parent=1 // pred_check
      _
    $region55: #{tpu_custom_call.1} parent=1 // pred_check_branch
      %624 = sbr.rel (0) target = $region57
    $region56: #{tpu_custom_call.1} parent=1 // pred_region
      %626 = vsyncadd [#allocation5], 0
      %s628 = sshll.u32 [#allocation12], 4
      %s629 = int_to_ptr.vmem [resolvable:$true] %s628
      %s630 = sshll.u32 %s8, 4
      %s631 = int_to_ptr.hbm [resolvable:$true] %s630
      %633 = dma.vmem_to_hbm [thread:$0]  %s629, 128, %s631, [#allocation5]
    $region57: #{tpu_custom_call.1} parent=1 // pred_fallthru
      _
    // Predicated region
    $region58: #{tpu_custom_call.1} parent=1 // pred_check
      _
    $region59: #{tpu_custom_call.1} parent=1 // pred_check_branch
      %635 = sbr.rel (0) target = $region61
    $region60: #{tpu_custom_call.1} parent=1 // pred_region
      %637 = vsyncadd [#allocation14], 0
      %s639 = sshll.u32 [#allocation13], 4
      %s640 = int_to_ptr.vmem [resolvable:$true] %s639
      %s641 = sshll.u32 %s9, 4
      %s642 = int_to_ptr.hbm [resolvable:$true] %s641
      %644 = dma.vmem_to_hbm [thread:$0]  %s640, 128, %s642, [#allocation14]
    $region61: #{tpu_custom_call.1} parent=1 // pred_fallthru
      _
    // Predicated region
    $region62: #{tpu_custom_call.1} parent=1 // pred_check
      _
    $region63: #{tpu_custom_call.1} parent=1 // pred_check_branch
      %646 = sbr.rel (0) target = $region65
    $region64: #{tpu_custom_call.1} parent=1 // pred_region
      %648 = dma.done [#allocation5], 128
    $region65: #{tpu_custom_call.1} parent=1 // pred_fallthru
      _
    // Predicated region
    $region66: #{tpu_custom_call.1} parent=1 // pred_check
      _
    $region67: #{tpu_custom_call.1} parent=1 // pred_check_branch
      %650 = sbr.rel (0) target = $region69
    $region68: #{tpu_custom_call.1} parent=1 // pred_region
      %652 = dma.done [#allocation14], 128
    $region69: #{tpu_custom_call.1} parent=1 // pred_fallthru
      _
    %653 = vsyncpa [#allocation4], 1
    %654 = vsyncpa [#allocation7], 1
    %655 = vsyncpa [#allocation10], 1
    %656 = vsyncpa [#allocation5], 1
    %657 = vsyncpa [#allocation14], 1

</llo_original>
